<compile_context>
chip_gen: v7x
topology: tpu7x:2x2x1
jax: 0.10.0
libtpu: 0.0.40
codegen_flags: <defaults>
</compile_context>

<pallas_src>
import jax
import jax.numpy as jnp
from jax.experimental import pallas as pl
from jax.experimental.pallas import tpu as pltpu


def _round_up(n: int, m: int) -> int:
    return ((n + m - 1) // m) * m


def policy_net_kernel(x_ref, w1_ref, b1_ref, w2_ref, b2_ref, mu_ref):
    # One batch tile: two MXU matmuls + tanh, all VMEM-resident.
    x = x_ref[...]                                                    # (TB, Sp)
    h = jnp.dot(x, w1_ref[...], preferred_element_type=jnp.float32)   # (TB, H)
    h = jnp.tanh(h + b1_ref[...])                                     # bias bcast (1, H)
    out = jnp.dot(h, w2_ref[...], preferred_element_type=jnp.float32) # (TB, Ap) lane-dense
    mu_ref[...] = (out + b2_ref[...]).astype(mu_ref.dtype)


def policy_net_forward(x, w1, b1, w2, b2, *, tb_max=512):
    """x: (batch, state_dim) f32. Returns (mu, sigma), each (batch, action_dim).

    sigma is the same fc2 output as mu (faithful to the PyTorch module), so we
    compute it once and return the same array twice.
    """
    B, S = x.shape
    S_w, H = w1.shape
    H_w, A = w2.shape
    assert S_w == S and H_w == H

    SUBLANE, LANE = 8, 128

    # --- one-time padding of tiny operands (wrapper-level, outside the kernel) ---
    Sp = max(SUBLANE, _round_up(S, SUBLANE))     # K of first matmul, sublane-aligned
    Ap = max(LANE, _round_up(A, LANE))           # output features, lane-dense

    w1p = jnp.zeros((Sp, H), w1.dtype).at[:S, :].set(w1)
    w2p = jnp.zeros((H, Ap), w2.dtype).at[:, :A].set(w2)
    b2p = jnp.zeros((1, Ap), b2.dtype).at[:, :A].set(b2)

    # --- batch tiling: TB rows per grid step, weights stay resident across steps ---
    B8 = _round_up(B, SUBLANE)
    TB = min(tb_max, B8)                          # multiple of 8, capped for VMEM
    Bp = _round_up(B8, TB)

    xp = jnp.zeros((Bp, Sp), jnp.float32).at[:B, :S].set(x.astype(jnp.float32))

    grid = (Bp // TB,)
    flops = 2 * Bp * (Sp * H + H * Ap)
    bytes_accessed = 4 * (Bp * Sp + Sp * H + H + H * Ap + Ap + Bp * Ap)

    mu_pad = pl.pallas_call(
        policy_net_kernel,
        out_shape=jax.ShapeDtypeStruct((Bp, Ap), jnp.float32),
        grid_spec=pltpu.PrefetchScalarGridSpec(
            num_scalar_prefetch=0,
            grid=grid,
            in_specs=[
                pl.BlockSpec((TB, Sp), lambda i: (i, 0)),   # x: blocked over batch
                pl.BlockSpec((Sp, H), lambda i: (0, 0)),    # w1: resident
                pl.BlockSpec((1, H), lambda i: (0, 0)),     # b1: resident
                pl.BlockSpec((H, Ap), lambda i: (0, 0)),    # w2: resident
                pl.BlockSpec((1, Ap), lambda i: (0, 0)),    # b2: resident
            ],
            out_specs=pl.BlockSpec((TB, Ap), lambda i: (i, 0)),
        ),
        compiler_params=pltpu.CompilerParams(
            dimension_semantics=("parallel",),
        ),
        cost_estimate=pl.CostEstimate(
            flops=flops,
            transcendentals=Bp * H,
            bytes_accessed=bytes_accessed,
        ),
    )(xp, w1p, b1, w2p, b2p)

    mu = mu_pad[:B, :A]
    return mu, mu                                  # sigma == mu (same fc2 layer)


def init_params(key, state_dim, hidden_dim, action_dim):
    """PyTorch-style init: U(-1/sqrt(fan_in), 1/sqrt(fan_in)); weights stored
    transposed vs nn.Linear.weight, i.e. (in_features, out_features)."""
    k1, k2, k3, k4 = jax.random.split(key, 4)
    bound1 = 1.0 / jnp.sqrt(jnp.float32(state_dim))
    bound2 = 1.0 / jnp.sqrt(jnp.float32(hidden_dim))
    w1 = jax.random.uniform(k1, (state_dim, hidden_dim), jnp.float32, -bound1, bound1)
    b1 = jax.random.uniform(k2, (1, hidden_dim), jnp.float32, -bound1, bound1)
    w2 = jax.random.uniform(k3, (hidden_dim, action_dim), jnp.float32, -bound2, bound2)
    b2 = jax.random.uniform(k4, (1, action_dim), jnp.float32, -bound2, bound2)
    return w1, b1, w2, b2


if __name__ == "__main__":
    state_dim, hidden_dim, action_dim = 4, 32, 2
    batch = 2

    key = jax.random.PRNGKey(0)
    kx, kp = jax.random.split(key)
    x = jax.random.normal(kx, (batch, state_dim), jnp.float32)
    w1, b1, w2, b2 = init_params(kp, state_dim, hidden_dim, action_dim)

    mu, sigma = policy_net_forward(x, w1, b1, w2, b2)
    jax.block_until_ready((mu, sigma))

    # Reference check in plain JAX
    h_ref = jnp.tanh(x @ w1 + b1)
    out_ref = h_ref @ w2 + b2
    assert mu.shape == (batch, action_dim) and sigma.shape == (batch, action_dim)
    assert jnp.allclose(mu, out_ref, atol=1e-5), "mu mismatch"
    assert jnp.allclose(sigma, out_ref, atol=1e-5), "sigma mismatch"
    assert jnp.array_equal(mu, sigma), "mu and sigma must be identical (same fc2)"

    # Also exercise a larger batch to cover the multi-step grid path.
    xb = jax.random.normal(kx, (1000, state_dim), jnp.float32)
    mub, sigb = policy_net_forward(xb, w1, b1, w2, b2)
    jax.block_until_ready((mub, sigb))
    refb = jnp.tanh(xb @ w1 + b1) @ w2 + b2
    assert jnp.allclose(mub, refb, atol=1e-5), "batched mu mismatch"

    print("KERNEL_OK")
</pallas_src>

<mosaic_0001>
module attributes {stable_mosaic.version = 11 : i64} {
  func.func @policy_net_kernel(%arg0: i32, %arg1: memref<8x8xf32, #tpu.memory_space<vmem>>, %arg2: memref<8x32xf32, #tpu.memory_space<vmem>>, %arg3: memref<1x32xf32, #tpu.memory_space<vmem>>, %arg4: memref<32x128xf32, #tpu.memory_space<vmem>>, %arg5: memref<1x128xf32, #tpu.memory_space<vmem>>, %arg6: memref<8x128xf32, #tpu.memory_space<vmem>>) attributes {dimension_semantics = [#tpu.dimension_semantics<parallel>], iteration_bounds = array<i64: 1>, scalar_prefetch = 0 : i64, scratch_operands = 0 : i64, tpu.core_type = #tpu.core_type<tc>, window_params = [{transform_indices = @transform_0, window_bounds = array<i64: 8, 8>}, {pipeline_mode = #tpu.pipeline_mode<synchronous>, transform_indices = @transform_1, window_bounds = array<i64: 8, 32>}, {pipeline_mode = #tpu.pipeline_mode<synchronous>, transform_indices = @transform_2, window_bounds = array<i64: 1, 32>}, {pipeline_mode = #tpu.pipeline_mode<synchronous>, transform_indices = @transform_3, window_bounds = array<i64: 32, 128>}, {pipeline_mode = #tpu.pipeline_mode<synchronous>, transform_indices = @transform_4, window_bounds = array<i64: 1, 128>}, {transform_indices = @transform_5, window_bounds = array<i64: 8, 128>}]} {
    %c0 = arith.constant 0 : index
    %c0_0 = arith.constant 0 : index
    %0 = vector.load %arg1[%c0, %c0_0] : memref<8x8xf32, #tpu.memory_space<vmem>>, vector<8x8xf32>
    %c0_1 = arith.constant 0 : index
    %c0_2 = arith.constant 0 : index
    %1 = vector.load %arg2[%c0_1, %c0_2] : memref<8x32xf32, #tpu.memory_space<vmem>>, vector<8x32xf32>
    %cst = arith.constant dense<0.000000e+00> : vector<8x32xf32>
    %2 = tpu.matmul %0, %1, %cst {dimension_numbers = #tpu.dot_dimension_numbers<[1], [0], [0], [1], [0, 0, 1, 1], [], []>} : vector<8x8xf32>, vector<8x32xf32>, vector<8x32xf32> -> vector<8x32xf32>
    %c0_3 = arith.constant 0 : index
    %c0_4 = arith.constant 0 : index
    %3 = vector.load %arg3[%c0_3, %c0_4] : memref<1x32xf32, #tpu.memory_space<vmem>>, vector<1x32xf32>
    %4 = vector.broadcast %3 : vector<1x32xf32> to vector<8x32xf32>
    %5 = arith.addf %2, %4 : vector<8x32xf32>
    %6 = math.tanh %5 : vector<8x32xf32>
    %c0_5 = arith.constant 0 : index
    %c0_6 = arith.constant 0 : index
    %7 = vector.load %arg4[%c0_5, %c0_6] : memref<32x128xf32, #tpu.memory_space<vmem>>, vector<32x128xf32>
    %cst_7 = arith.constant dense<0.000000e+00> : vector<8x128xf32>
    %8 = tpu.matmul %6, %7, %cst_7 {dimension_numbers = #tpu.dot_dimension_numbers<[1], [0], [0], [1], [0, 0, 1, 1], [], []>} : vector<8x32xf32>, vector<32x128xf32>, vector<8x128xf32> -> vector<8x128xf32>
    %c0_8 = arith.constant 0 : index
    %c0_9 = arith.constant 0 : index
    %9 = vector.load %arg5[%c0_8, %c0_9] : memref<1x128xf32, #tpu.memory_space<vmem>>, vector<1x128xf32>
    %10 = vector.broadcast %9 : vector<1x128xf32> to vector<8x128xf32>
    %11 = arith.addf %8, %10 : vector<8x128xf32>
    %c0_10 = arith.constant 0 : index
    %c0_11 = arith.constant 0 : index
    %12 = vector.load %arg6[%c0_10, %c0_11] : memref<8x128xf32, #tpu.memory_space<vmem>>, vector<8x128xf32>
    tpu.vector_store %arg6[%c0_10, %c0_11], %11 {strides = array<i32>} : memref<8x128xf32, #tpu.memory_space<vmem>>, vector<8x128xf32>,
    return
  }
  func.func @transform_0(%arg0: i32) -> (i32, i32) {
    %c0_i32 = arith.constant 0 : i32
    %c0_i32_0 = arith.constant 0 : i32
    return %arg0, %c0_i32 : i32, i32
  }
  func.func @transform_1(%arg0: i32) -> (i32, i32) {
    %c0_i32 = arith.constant 0 : i32
    %c0_i32_0 = arith.constant 0 : i32
    %c0_i32_1 = arith.constant 0 : i32
    return %c0_i32, %c0_i32_0 : i32, i32
  }
  func.func @transform_2(%arg0: i32) -> (i32, i32) {
    %c0_i32 = arith.constant 0 : i32
    %c0_i32_0 = arith.constant 0 : i32
    %c0_i32_1 = arith.constant 0 : i32
    return %c0_i32, %c0_i32_0 : i32, i32
  }
  func.func @transform_3(%arg0: i32) -> (i32, i32) {
    %c0_i32 = arith.constant 0 : i32
    %c0_i32_0 = arith.constant 0 : i32
    %c0_i32_1 = arith.constant 0 : i32
    return %c0_i32, %c0_i32_0 : i32, i32
  }
  func.func @transform_4(%arg0: i32) -> (i32, i32) {
    %c0_i32 = arith.constant 0 : i32
    %c0_i32_0 = arith.constant 0 : i32
    %c0_i32_1 = arith.constant 0 : i32
    return %c0_i32, %c0_i32_0 : i32, i32
  }
  func.func @transform_5(%arg0: i32) -> (i32, i32) {
    %c0_i32 = arith.constant 0 : i32
    %c0_i32_0 = arith.constant 0 : i32
    return %arg0, %c0_i32 : i32, i32
  }
}

</mosaic_0001>

<llo_original>
// kernel: tpu_custom_call.1
$region0: #{tpu_custom_call.1}
  #allocation0 [shape = 'u32[]', space=smem, size = 0x4, offset = 0x4, fixed_abs, tag = 'smem constant byte address 0x4 - core index']
  #allocation1 [shape = 'u32[144,128]{1,0:T(1,128)}', space=vmem, size = 0x12000, scoped, tag = 'internal scratch']
  %s0 = inlined_call_operand.hbm [shape: f32[8,8], index: 0, kind: input, shape index: {}]
  %s1 = inlined_call_operand.hbm [shape: f32[8,32], index: 1, kind: input, shape index: {}]
  %s2 = inlined_call_operand.vmem [shape: f32[1,32], index: 2, kind: input, shape index: {}]
  %s3 = inlined_call_operand.hbm [shape: f32[32,128], index: 3, kind: input, shape index: {}]
  %s4 = inlined_call_operand.vmem [shape: f32[1,128], index: 4, kind: input, shape index: {}]
  %s5 = inlined_call_operand.hbm [shape: f32[8,128], index: 5, kind: output, shape index: {}]
  %s6 = sld [smem:[#allocation0]]
  $region42: #{tpu_custom_call.1} parent=0
    _
  %s8 = ssub.s32 1, %s6
  %s9 = scalar_select 0, %s8, %s6
  $region1: #{tpu_custom_call.1} parent=0
    #allocation2 [shape = 'u8[4096]{0}', space=vmem, size = 0x1000, scoped, tag = 'input window, operand 0, single buffered']
    #allocation3 [shape = 's32[1]{0}', space=sflag, size = 0x4, scoped, tag = 'scoped memory for tpu_custom_call.1']
    #allocation4 [shape = 's32[1]{0}', space=sflag, size = 0x4, scoped, tag = 'scoped memory for tpu_custom_call.1']
    #allocation5 [shape = 'u8[4096]{0}', space=vmem, size = 0x1000, scoped, tag = 'input window, operand 1, single buffered']
    #allocation6 [shape = 's32[1]{0}', space=sflag, size = 0x4, scoped, tag = 'scoped memory for tpu_custom_call.1']
    #allocation7 [shape = 'u8[16384]{0}', space=vmem, size = 0x4000, scoped, tag = 'input window, operand 3, single buffered']
    #allocation8 [shape = 'u8[4096]{0}', space=vmem, size = 0x1000, scoped, tag = 'output window, operand 0, single buffered']
    %10 = vsyncpa [#allocation3], 0
    %11 = vsyncpa [#allocation6], 0
    %12 = vsyncpa [#allocation4], 0
    // Predicated region
    $region2: #{tpu_custom_call.1} parent=1 // pred_check
      _
    $region3: #{tpu_custom_call.1} parent=1 // pred_check_branch
      %14 = sbr.rel (0) target = $region5
    $region4: #{tpu_custom_call.1} parent=1 // pred_region
      %s16 = ssub.s32 128, 128
      %17 = vsyncadd [#allocation3], %s16
      %s19 = sshll.u32 [#allocation2], 4
      %s20 = int_to_ptr.vmem [resolvable:$true] %s19
      %22 = dma.hbm_to_vmem [thread:$0]  %s0, 128, %s20, [#allocation3]
    $region5: #{tpu_custom_call.1} parent=1 // pred_fallthru
      _
    // Predicated region
    $region6: #{tpu_custom_call.1} parent=1 // pred_check
      _
    $region7: #{tpu_custom_call.1} parent=1 // pred_check_branch
      %24 = sbr.rel (0) target = $region9
    $region8: #{tpu_custom_call.1} parent=1 // pred_region
      %s26 = ssub.s32 128, 128
      %27 = vsyncadd [#allocation6], %s26
      %s29 = sshll.u32 [#allocation5], 4
      %s30 = int_to_ptr.vmem [resolvable:$true] %s29
      %32 = dma.hbm_to_vmem [thread:$0]  %s1, 128, %s30, [#allocation6]
    $region9: #{tpu_custom_call.1} parent=1 // pred_fallthru
      _
    // Predicated region
    $region10: #{tpu_custom_call.1} parent=1 // pred_check
      _
    $region11: #{tpu_custom_call.1} parent=1 // pred_check_branch
      %34 = sbr.rel (0) target = $region13
    $region12: #{tpu_custom_call.1} parent=1 // pred_region
      _
    $region13: #{tpu_custom_call.1} parent=1 // pred_fallthru
      _
    // Predicated region
    $region14: #{tpu_custom_call.1} parent=1 // pred_check
      _
    $region15: #{tpu_custom_call.1} parent=1 // pred_check_branch
      %36 = sbr.rel (0) target = $region17
    $region16: #{tpu_custom_call.1} parent=1 // pred_region
      %s38 = ssub.s32 512, 512
      %39 = vsyncadd [#allocation6], %s38
      %s40 = sshll.u32 [#allocation7], 4
      %s41 = int_to_ptr.vmem [resolvable:$true] %s40
      %46 = dma.hbm_to_vmem [thread:$0]  %s3, 512, %s41, [#allocation6], 128, 128, 8
    $region17: #{tpu_custom_call.1} parent=1 // pred_fallthru
      _
    // Predicated region
    $region18: #{tpu_custom_call.1} parent=1 // pred_check
      _
    $region19: #{tpu_custom_call.1} parent=1 // pred_check_branch
      %48 = sbr.rel (0) target = $region21
    $region20: #{tpu_custom_call.1} parent=1 // pred_region
      _
    $region21: #{tpu_custom_call.1} parent=1 // pred_fallthru
      _
    // Predicated region
    $region22: #{tpu_custom_call.1} parent=1 // pred_check
      _
    $region23: #{tpu_custom_call.1} parent=1 // pred_check_branch
      %50 = sbr.rel (0) target = $region25
    $region24: #{tpu_custom_call.1} parent=1 // pred_region
      %51 = dma.done [#allocation3], 128
    $region25: #{tpu_custom_call.1} parent=1 // pred_fallthru
      _
    // Predicated region
    $region26: #{tpu_custom_call.1} parent=1 // pred_check
      _
    $region27: #{tpu_custom_call.1} parent=1 // pred_check_branch
      %53 = sbr.rel (0) target = $region29
    $region28: #{tpu_custom_call.1} parent=1 // pred_region
      %54 = dma.done [#allocation6], 128
    $region29: #{tpu_custom_call.1} parent=1 // pred_fallthru
      _
    // Predicated region
    $region30: #{tpu_custom_call.1} parent=1 // pred_check
      _
    $region31: #{tpu_custom_call.1} parent=1 // pred_check_branch
      %56 = sbr.rel (0) target = $region33
    $region32: #{tpu_custom_call.1} parent=1 // pred_region
      %57 = dma.done [#allocation6], 512
    $region33: #{tpu_custom_call.1} parent=1 // pred_fallthru
      _
    %v58 = vld [vmem:[#allocation2] sm:$0xff]
    %v59 = vld [vmem:[#allocation5] sm:$0xff]
    %v60 = vld [vmem:[%s2] sm:$0x1]
    %v62 = vlaneseq
    %v63 = vshrl.u32 %v62, 7
    %v64 = vsub.s32 0, %v63
    %v65 = vrot.slane %v60, %v64
    %vm67 = vcmask 64512
    %v69 = vsel %vm67, %v58, 0
    %71 = vmatprep.subr.mxu0 0.0
    %72 = vmatpush1.msra.mxu0 %v59
    %73 = vmatprep.subr.mxu0 0.0
    %74 = vmatpush1.msra.mxu0 0.0
    %75 = vmatprep.subr.mxu0 0.0
    %76 = vmatpush1.msra.mxu0 0.0
    %77 = vmatprep.subr.mxu0 0.0
    %78 = vmatpush1.msra.mxu0 0.0
    %79 = vmatprep.subr.mxu0 0.0
    %80 = vmatpush1.msra.mxu0 0.0
    %81 = vmatprep.subr.mxu0 0.0
    %82 = vmatpush1.msra.mxu0 0.0
    %83 = vmatprep.subr.mxu0 0.0
    %84 = vmatpush1.msra.mxu0 0.0
    %85 = vmatprep.subr.mxu0 0.0
    %86 = vmatpush1.msra.mxu0 0.0
    %87 = vmatprep.subr.mxu0 0.0
    %88 = vmatpush1.msra.mxu0 0.0
    %89 = vmatprep.subr.mxu0 0.0
    %90 = vmatpush1.msra.mxu0 0.0
    %91 = vmatprep.subr.mxu0 0.0
    %92 = vmatpush1.msra.mxu0 0.0
    %93 = vmatprep.subr.mxu0 0.0
    %94 = vmatpush1.msra.mxu0 0.0
    %95 = vmatprep.subr.mxu0 0.0
    %96 = vmatpush1.msra.mxu0 0.0
    %97 = vmatprep.subr.mxu0 0.0
    %98 = vmatpush1.msra.mxu0 0.0
    %99 = vmatprep.subr.mxu0 0.0
    %100 = vmatpush1.msra.mxu0 0.0
    %101 = vmatprep.subr.mxu0 0.0
    %102 = vmatpush1.msra.mxu0 0.0
    %103 = vmatprep.subr.mxu0 0.0
    %104 = vmatpush1.msra.mxu0 0.0
    %105 = vmatprep.subr.mxu0 0.0
    %106 = vmatpush1.msra.mxu0 0.0
    %107 = vmatprep.subr.mxu0 0.0
    %108 = vmatpush1.msra.mxu0 0.0
    %109 = vmatprep.subr.mxu0 0.0
    %110 = vmatpush1.msra.mxu0 0.0
    %111 = vmatprep.subr.mxu0 0.0
    %112 = vmatpush1.msra.mxu0 0.0
    %113 = vmatprep.subr.mxu0 0.0
    %114 = vmatpush1.msra.mxu0 0.0
    %115 = vmatprep.subr.mxu0 0.0
    %116 = vmatpush1.msra.mxu0 0.0
    %117 = vmatprep.subr.mxu0 0.0
    %118 = vmatpush1.msra.mxu0 0.0
    %119 = vmatprep.subr.mxu0 0.0
    %120 = vmatpush1.msra.mxu0 0.0
    %121 = vmatprep.subr.mxu0 0.0
    %122 = vmatpush1.msra.mxu0 0.0
    %123 = vmatprep.subr.mxu0 0.0
    %124 = vmatpush1.msra.mxu0 0.0
    %125 = vmatprep.subr.mxu0 0.0
    %126 = vmatpush1.msra.mxu0 0.0
    %127 = vmatprep.subr.mxu0 0.0
    %128 = vmatpush1.msra.mxu0 0.0
    %129 = vmatprep.subr.mxu0 0.0
    %130 = vmatpush1.msra.mxu0 0.0
    %131 = vmatprep.subr.mxu0 0.0
    %132 = vmatpush1.msra.mxu0 0.0
    %133 = vmatprep.subr.mxu0 0.0
    %134 = vmatpush1.msra.mxu0 0.0
    %135 = vmatprep.mubr.f32.mxu0 0.0
    %136 = vmatmul.mubr.f32.gmra.mrb[0].mxu0 %v69
    %v137 = vpop.f32.mrb[0].mxu0
    %v138 = vadd.f32 %v65, %v137
    %v139 = vpop.f32.mrb[0].mxu0
    %140 = vdwg.mxu0
    %v141 = vtanh.pop %v138
    %v142 = vld [vmem:[#allocation7] sm:$0xff]
    %v143 = vld [vmem:[#allocation7 + $0x8] sm:$0xff]
    %v144 = vld [vmem:[#allocation7 + $0x10] sm:$0xff]
    %v145 = vld [vmem:[#allocation7 + $0x18] sm:$0xff]
    %v146 = vld [vmem:[%s4] sm:$0x1]
    %v148 = vlaneseq
    %v149 = vshrl.u32 %v148, 7
    %v150 = vsub.s32 0, %v149
    %v151 = vrot.slane %v146, %v150
    %vm153 = vcmask 261120
    %v155 = vsel %vm153, %v141, 0
    %157 = vmatprep.subr.mxu0 0.0
    %158 = vmatpush1.msra.mxu0 %v142
    %159 = vmatprep.subr.mxu0 0.0
    %160 = vmatpush1.msra.mxu0 %v143
    %161 = vmatprep.subr.mxu0 0.0
    %162 = vmatpush1.msra.mxu0 %v144
    %163 = vmatprep.subr.mxu0 0.0
    %164 = vmatpush1.msra.mxu0 %v145
    %165 = vmatprep.subr.mxu0 0.0
    %166 = vmatpush1.msra.mxu0 0.0
    %167 = vmatprep.subr.mxu0 0.0
    %168 = vmatpush1.msra.mxu0 0.0
    %169 = vmatprep.subr.mxu0 0.0
    %170 = vmatpush1.msra.mxu0 0.0
    %171 = vmatprep.subr.mxu0 0.0
    %172 = vmatpush1.msra.mxu0 0.0
    %173 = vmatprep.subr.mxu0 0.0
    %174 = vmatpush1.msra.mxu0 0.0
    %175 = vmatprep.subr.mxu0 0.0
    %176 = vmatpush1.msra.mxu0 0.0
    %177 = vmatprep.subr.mxu0 0.0
    %178 = vmatpush1.msra.mxu0 0.0
    %179 = vmatprep.subr.mxu0 0.0
    %180 = vmatpush1.msra.mxu0 0.0
    %181 = vmatprep.subr.mxu0 0.0
    %182 = vmatpush1.msra.mxu0 0.0
    %183 = vmatprep.subr.mxu0 0.0
    %184 = vmatpush1.msra.mxu0 0.0
    %185 = vmatprep.subr.mxu0 0.0
    %186 = vmatpush1.msra.mxu0 0.0
    %187 = vmatprep.subr.mxu0 0.0
    %188 = vmatpush1.msra.mxu0 0.0
    %189 = vmatprep.subr.mxu0 0.0
    %190 = vmatpush1.msra.mxu0 0.0
    %191 = vmatprep.subr.mxu0 0.0
    %192 = vmatpush1.msra.mxu0 0.0
    %193 = vmatprep.subr.mxu0 0.0
    %194 = vmatpush1.msra.mxu0 0.0
    %195 = vmatprep.subr.mxu0 0.0
    %196 = vmatpush1.msra.mxu0 0.0
    %197 = vmatprep.subr.mxu0 0.0
    %198 = vmatpush1.msra.mxu0 0.0
    %199 = vmatprep.subr.mxu0 0.0
    %200 = vmatpush1.msra.mxu0 0.0
    %201 = vmatprep.subr.mxu0 0.0
    %202 = vmatpush1.msra.mxu0 0.0
    %203 = vmatprep.subr.mxu0 0.0
    %204 = vmatpush1.msra.mxu0 0.0
    %205 = vmatprep.subr.mxu0 0.0
    %206 = vmatpush1.msra.mxu0 0.0
    %207 = vmatprep.subr.mxu0 0.0
    %208 = vmatpush1.msra.mxu0 0.0
    %209 = vmatprep.subr.mxu0 0.0
    %210 = vmatpush1.msra.mxu0 0.0
    %211 = vmatprep.subr.mxu0 0.0
    %212 = vmatpush1.msra.mxu0 0.0
    %213 = vmatprep.subr.mxu0 0.0
    %214 = vmatpush1.msra.mxu0 0.0
    %215 = vmatprep.subr.mxu0 0.0
    %216 = vmatpush1.msra.mxu0 0.0
    %217 = vmatprep.subr.mxu0 0.0
    %218 = vmatpush1.msra.mxu0 0.0
    %219 = vmatprep.subr.mxu0 0.0
    %220 = vmatpush1.msra.mxu0 0.0
    %221 = vmatprep.mubr.f32.mxu0 0.0
    %222 = vmatmul.mubr.f32.gmra.mrb[0].mxu0 %v155
    %v223 = vpop.f32.mrb[0].mxu0
    %v224 = vadd.f32 %v151, %v223
    %v225 = vpop.f32.mrb[0].mxu0
    %226 = vdwg.mxu0
    %227 = vst [vmem:[#allocation8] sm:$0xff] %v224
    // Predicated region
    $region34: #{tpu_custom_call.1} parent=1 // pred_check
      _
    $region35: #{tpu_custom_call.1} parent=1 // pred_check_branch
      %229 = sbr.rel (0) target = $region37
    $region36: #{tpu_custom_call.1} parent=1 // pred_region
      %s231 = ssub.s32 128, 128
      %232 = vsyncadd [#allocation4], %s231
      %s234 = sshll.u32 [#allocation8], 4
      %s235 = int_to_ptr.vmem [resolvable:$true] %s234
      %237 = dma.vmem_to_hbm [thread:$0]  %s235, 128, %s5, [#allocation4]
    $region37: #{tpu_custom_call.1} parent=1 // pred_fallthru
      _
    // Predicated region
    $region38: #{tpu_custom_call.1} parent=1 // pred_check
      _
    $region39: #{tpu_custom_call.1} parent=1 // pred_check_branch
      %239 = sbr.rel (0) target = $region41
    $region40: #{tpu_custom_call.1} parent=1 // pred_region
      %240 = dma.done [#allocation4], 128
    $region41: #{tpu_custom_call.1} parent=1 // pred_fallthru
      _
    %241 = vsyncpa [#allocation3], 1
    %242 = vsyncpa [#allocation6], 1
    %243 = vsyncpa [#allocation4], 1

</llo_original>
